<compile_context>
chip_gen: v7x
topology: tpu7x:2x2x1
jax: 0.10.0
libtpu: 0.0.40
codegen_flags: <defaults>
</compile_context>

<pallas_src>
import functools

import jax
import jax.numpy as jnp
from jax.experimental import pallas as pl
from jax.experimental.pallas import tpu as pltpu


def _round_up(x, m):
    return (x + m - 1) // m * m


def _pick_tile(s):
    """Lane tile for a level with s = ny*nx pixels per image."""
    if s <= 1024:
        return s                       # full-extent block: always layout-legal
    for ts in (1024, 896, 768, 640, 512, 384, 256, 128):
        if s % ts == 0:
            return ts
    return 1024                        # ragged last block: Pallas masks the partial writes


# ----------------------------- Pallas kernel --------------------------------
def _detect_level_kernel(feat_ref, w_ref, ba_ref, g_ref, *out_refs,
                         no, stride2, compute_dtype, emit_raw):
    if emit_raw:
        raw_ref, dec_ref = out_refs
    else:
        (dec_ref,) = out_refs

    # 1x1 conv == matmul over channels; lane dim = pixels.  bf16 operands hit the
    # native MXU path; accumulation and everything downstream stays f32.
    ba = ba_ref[...]                                    # (Cp, 2): [bias | anchor*stride]
    raw = jnp.dot(w_ref[...],
                  feat_ref[...].astype(compute_dtype),
                  preferred_element_type=jnp.float32)
    raw = raw + ba[:, 0:1]                              # bias (f32)

    if emit_raw:
        # TODO(synk): for pure-inference deployments this could be emitted in bf16 (or
        # skipped via return_raw=False) to cut HBM write bytes; kept f32 for semantics.
        raw_ref[...] = raw.astype(raw_ref.dtype)

    # Fused decode (inference branch of Detect.forward); kept in f32 for v5e.
    sig = jax.nn.sigmoid(raw)
    cp = raw.shape[0]
    o = jax.lax.broadcasted_iota(jnp.int32, (cp, 1), 0) % no   # row -> output index

    g = g_ref[...]                                      # (2, TS)
    gx = g[0:1, :]                                      # (1, TS): (x - 0.5) * stride
    gy = g[1:2, :]                                      # (1, TS): (y - 0.5) * stride
    anch = ba[:, 1:2]                                   # (Cp, 1): anchor*stride at o in {2,3}

    # NOTE: the full-(Cp,TS) box math for all rows costs ~10 extra VPU ops/elem but is
    # expected to be free filler under DMA; revisit only if a bundle dump shows VALU is
    # the binding slot (perf review item #11).
    grid_sel = jnp.where(o == 0, gx, gy)                # (Cp, TS)
    xy = sig * stride2 + grid_sel                       # stride2 = 2*stride (constant)
    wh = (sig * 2.0) ** 2 * anch
    dec = jnp.where(o < 2, xy, jnp.where(o < 4, wh, sig))
    dec_ref[...] = dec.astype(dec_ref.dtype)


# ------------------------------ wrapper --------------------------------------
def detect_forward(xs, params, anchors, strides, nc, *,
                   compute_dtype=jnp.bfloat16, return_raw=True):
    """Detect.forward in eval mode.

    xs      : list of (bs, ch_i, ny_i, nx_i) feature maps (NCHW, any float dtype)
    params  : list of (weight (C, ch_i), bias (C,)) for the 1x1 convs
    anchors : (nl, na, 2) float32
    strides : sequence of nl floats
    Returns (cat(z,1), x_list) if return_raw else (cat(z,1),)   [export mode].
    """
    na = anchors.shape[1]
    no = nc + 5
    C = na * no
    Cp = _round_up(C, 8)      # sublane-friendly row count; rows C..Cp are sliced off

    z, x_out = [], []
    for i, x in enumerate(xs):
        bs, ch, ny, nx = x.shape
        S = ny * nx
        stride = float(strides[i])
        TS = _pick_tile(S)
        nblk = pl.cdiv(S, TS)

        # Free reshape (trailing contiguous dims merged) -- NO transpose/pad/concat pass.
        feat = x.reshape(bs, ch, S)

        # Tiny per-level constants.
        w, bvec = params[i]
        wp = jnp.pad(w.astype(compute_dtype), ((0, Cp - C), (0, 0)))          # (Cp, ch)
        aw = anchors[i].astype(jnp.float32) * stride                          # (na, 2)
        anch_col = jnp.concatenate(
            [jnp.zeros((na, 2), jnp.float32), aw,
             jnp.zeros((na, no - 4), jnp.float32)], axis=1).reshape(C, 1)
        ba = jnp.pad(
            jnp.concatenate([bvec.astype(jnp.float32).reshape(C, 1), anch_col], axis=1),
            ((0, Cp - C), (0, 0)))                                            # (Cp, 2)

        gx = jnp.tile((jnp.arange(nx, dtype=jnp.float32) - 0.5) * stride, ny)
        gy = jnp.repeat((jnp.arange(ny, dtype=jnp.float32) - 0.5) * stride, nx)
        gtab = jnp.stack([gx, gy])                                            # (2, S)

        kern = functools.partial(_detect_level_kernel, no=no, stride2=2.0 * stride,
                                 compute_dtype=compute_dtype, emit_raw=return_raw)

        n_out = 2 if return_raw else 1
        out_shape = (jax.ShapeDtypeStruct((bs, Cp, S), jnp.float32),) * n_out
        out_block = pl.BlockSpec((pl.Squeezed(), Cp, TS), lambda b, j: (b, 0, j))
        out_specs = (out_block,) * n_out

        cost = pl.CostEstimate(
            flops=int(2 * Cp * ch * S * bs + 10 * Cp * S * bs),
            transcendentals=int(Cp * S * bs),
            bytes_accessed=int(x.dtype.itemsize * bs * ch * S
                               + wp.size * wp.dtype.itemsize
                               + ba.size * 4 + gtab.size * 4
                               + 4 * bs * Cp * S * n_out),
        )

        outs = pl.pallas_call(
            kern,
            out_shape=out_shape,
            grid=(bs, nblk),
            in_specs=[
                pl.BlockSpec((pl.Squeezed(), ch, TS), lambda b, j: (b, 0, j)),  # features
                pl.BlockSpec((Cp, ch), lambda b, j: (0, 0)),                    # weight
                pl.BlockSpec((Cp, 2), lambda b, j: (0, 0)),                     # bias|anchor
                pl.BlockSpec((2, TS), lambda b, j: (0, j)),                     # gx|gy
            ],
            out_specs=out_specs,
            compiler_params=pltpu.CompilerParams(
                dimension_semantics=("parallel", "parallel")),
            cost_estimate=cost,
        )(feat, wp, ba, gtab)

        if return_raw:
            raw_full, dec_full = outs
            raw_l = (raw_full[:, :C, :].reshape(bs, na, no, ny, nx)
                     .transpose(0, 1, 3, 4, 2))                    # (bs, na, ny, nx, no)
            x_out.append(raw_l.astype(x.dtype))
        else:
            (dec_full,) = outs

        dec_l = (dec_full[:, :C, :].reshape(bs, na, no, ny, nx)
                 .transpose(0, 1, 3, 4, 2))                        # (bs, na, ny, nx, no)
        z.append(dec_l.reshape(bs, na * ny * nx, no))

    zc = jnp.concatenate(z, axis=1)
    return (zc, x_out) if return_raw else (zc,)


# --------------------------- pure-JAX reference -------------------------------
def reference_forward(xs, params, anchors, strides, nc):
    na = anchors.shape[1]
    no = nc + 5
    z, x_list = [], []
    for i, x in enumerate(xs):
        w, b = params[i]
        bs, _, ny, nx = x.shape
        conv = jnp.einsum('bchw,oc->bohw', x, w) + b[:, None, None]
        xi = conv.reshape(bs, na, no, ny, nx).transpose(0, 1, 3, 4, 2)
        x_list.append(xi)
        yv, xv = jnp.meshgrid(jnp.arange(ny, dtype=jnp.float32),
                              jnp.arange(nx, dtype=jnp.float32), indexing='ij')
        grid = jnp.stack((xv, yv), 2)[None, None] - 0.5
        anchor_grid = (anchors[i] * strides[i]).reshape(1, na, 1, 1, 2)
        sig = jax.nn.sigmoid(xi)
        xy = (sig[..., 0:2] * 2 + grid) * strides[i]
        wh = (sig[..., 2:4] * 2) ** 2 * anchor_grid
        y = jnp.concatenate((xy, wh, sig[..., 4:]), -1)
        z.append(y.reshape(bs, na * ny * nx, no))
    return jnp.concatenate(z, 1), x_list


# ------------------------------- main ----------------------------------------
if __name__ == "__main__":
    nc = 3
    anchors_cfg = ((10, 13, 16, 30, 33, 23),
                   (30, 61, 62, 45, 59, 119),
                   (116, 90, 156, 198, 373, 326))
    ch = (4, 8, 16)
    strides = (8.0, 16.0, 32.0)
    spatial = ((16, 16), (8, 8), (4, 4))
    bs = 2

    nl = len(anchors_cfg)
    na = len(anchors_cfg[0]) // 2
    no = nc + 5
    C = na * no
    anchors = jnp.asarray(anchors_cfg, dtype=jnp.float32).reshape(nl, na, 2)

    key = jax.random.PRNGKey(0)
    params, xs = [], []
    for i in range(nl):
        key, kw, kb, kx = jax.random.split(key, 4)
        w = 0.1 * jax.random.normal(kw, (C, ch[i]), dtype=jnp.float32)   # 1x1 conv weight
        b = 0.05 * jax.random.normal(kb, (C,), dtype=jnp.float32)        # conv bias
        params.append((w, b))
        ny, nx = spatial[i]
        xs.append(jax.random.normal(kx, (bs, ch[i], ny, nx), dtype=jnp.float32))

    z_ref, x_ref = reference_forward(xs, params, anchors, strides, nc)

    # Strict correctness check: f32 matmul path.
    z32, x32 = detect_forward(xs, params, anchors, strides, nc,
                              compute_dtype=jnp.float32)
    jax.block_until_ready(z32)
    assert z32.shape == (bs, sum(na * h * w for (h, w) in spatial), no)
    assert jnp.allclose(z32, z_ref, atol=1e-4, rtol=1e-4), "f32 decoded output mismatch"
    for a, r in zip(x32, x_ref):
        assert a.shape == r.shape
        assert jnp.allclose(a, r, atol=1e-4, rtol=1e-4), "f32 raw output mismatch"

    # Production path: bf16 matmul operands (f32 accumulate / decode); looser tolerance
    # vs the f32 reference as flagged in the perf review.
    z, x_list = detect_forward(xs, params, anchors, strides, nc)     # bf16 default
    jax.block_until_ready(z)
    for xo in x_list:
        jax.block_until_ready(xo)
    assert jnp.allclose(z, z_ref, atol=0.5, rtol=5e-2), "bf16 decoded output mismatch"
    for a, r in zip(x_list, x_ref):
        assert jnp.allclose(a, r, atol=5e-2, rtol=2e-2), "bf16 raw output mismatch"

    print("KERNEL_OK")
</pallas_src>

<mosaic_0001>
module attributes {stable_mosaic.version = 11 : i64} {
  func.func @_detect_level_kernel(%arg0: i32, %arg1: i32, %arg2: memref<1x4x256xf32, #tpu.memory_space<vmem>>, %arg3: memref<24x4xf32, #tpu.memory_space<vmem>>, %arg4: memref<24x2xf32, #tpu.memory_space<vmem>>, %arg5: memref<2x256xf32, #tpu.memory_space<vmem>>, %arg6: memref<1x24x256xf32, #tpu.memory_space<vmem>>, %arg7: memref<1x24x256xf32, #tpu.memory_space<vmem>>) attributes {dimension_semantics = [#tpu.dimension_semantics<parallel>, #tpu.dimension_semantics<parallel>], iteration_bounds = array<i64: 2, 1>, scalar_prefetch = 0 : i64, scratch_operands = 0 : i64, tpu.core_type = #tpu.core_type<tc>, window_params = [{transform_indices = @transform_0, window_bounds = array<i64: 1, 4, 256>}, {pipeline_mode = #tpu.pipeline_mode<synchronous>, transform_indices = @transform_1, window_bounds = array<i64: 24, 4>}, {pipeline_mode = #tpu.pipeline_mode<synchronous>, transform_indices = @transform_2, window_bounds = array<i64: 24, 2>}, {transform_indices = @transform_3, window_bounds = array<i64: 2, 256>}, {transform_indices = @transform_4, window_bounds = array<i64: 1, 24, 256>}, {transform_indices = @transform_5, window_bounds = array<i64: 1, 24, 256>}]} {
    %c0 = arith.constant 0 : index
    %c0_0 = arith.constant 0 : index
    %0 = vector.load %arg4[%c0, %c0_0] : memref<24x2xf32, #tpu.memory_space<vmem>>, vector<24x2xf32>
    %c0_1 = arith.constant 0 : index
    %c0_2 = arith.constant 0 : index
    %1 = vector.load %arg3[%c0_1, %c0_2] : memref<24x4xf32, #tpu.memory_space<vmem>>, vector<24x4xf32>
    %c0_3 = arith.constant 0 : index
    %c0_4 = arith.constant 0 : index
    %c0_5 = arith.constant 0 : index
    %2 = vector.load %arg2[%c0_3, %c0_4, %c0_5] : memref<1x4x256xf32, #tpu.memory_space<vmem>>, vector<1x4x256xf32>
    %3 = vector.shape_cast %2 : vector<1x4x256xf32> to vector<4x256xf32>
    %cst = arith.constant dense<0.000000e+00> : vector<24x256xf32>
    %4 = tpu.matmul %1, %3, %cst {dimension_numbers = #tpu.dot_dimension_numbers<[1], [0], [0], [1], [0, 0, 1, 1], [], []>} : vector<24x4xf32>, vector<4x256xf32>, vector<24x256xf32> -> vector<24x256xf32>
    %5 = vector.extract_strided_slice %0 {offsets = [0, 0], sizes = [24, 1], strides = [1, 1]} : vector<24x2xf32> to vector<24x1xf32>
    %6 = vector.broadcast %5 : vector<24x1xf32> to vector<24x256xf32>
    %7 = arith.addf %4, %6 : vector<24x256xf32>
    %c0_6 = arith.constant 0 : index
    %c0_7 = arith.constant 0 : index
    %c0_8 = arith.constant 0 : index
    %8 = vector.load %arg6[%c0_6, %c0_7, %c0_8] : memref<1x24x256xf32, #tpu.memory_space<vmem>>, vector<1x24x256xf32>
    %9 = vector.shape_cast %8 : vector<1x24x256xf32> to vector<24x256xf32>
    %10 = vector.shape_cast %7 : vector<24x256xf32> to vector<1x24x256xf32>
    tpu.vector_store %arg6[%c0_6, %c0_7, %c0_8], %10 {strides = array<i32>} : memref<1x24x256xf32, #tpu.memory_space<vmem>>, vector<1x24x256xf32>,
    %11 = arith.negf %7 : vector<24x256xf32>
    %12 = math.exp %11 : vector<24x256xf32>
    %cst_9 = arith.constant 1.000000e+00 : f32
    %13 = vector.broadcast %cst_9 : f32 to vector<24x256xf32>
    %14 = arith.addf %13, %12 : vector<24x256xf32>
    %15 = arith.divf %13, %14 : vector<24x256xf32>
    %16 = tpu.iota {dimensions = array<i32: 0>} : vector<24x1xi32>
    %c8_i32 = arith.constant 8 : i32
    %c0_i32 = arith.constant 0 : i32
    %17 = arith.cmpi eq, %c8_i32, %c0_i32 : i32
    %c1_i32 = arith.constant 1 : i32
    %18 = arith.select %17, %c1_i32, %c8_i32 : i32
    %19 = vector.broadcast %18 : i32 to vector<24x1xi32>
    %20 = arith.remsi %16, %19 : vector<24x1xi32>
    %c0_i32_10 = arith.constant 0 : i32
    %21 = vector.broadcast %c0_i32_10 : i32 to vector<24x1xi32>
    %22 = arith.cmpi ne, %20, %21 : vector<24x1xi32>
    %c0_i32_11 = arith.constant 0 : i32
    %23 = vector.broadcast %c0_i32_11 : i32 to vector<24x1xi32>
    %24 = arith.cmpi slt, %20, %23 : vector<24x1xi32>
    %c0_i32_12 = arith.constant 0 : i32
    %25 = arith.cmpi slt, %18, %c0_i32_12 : i32
    %26 = vector.broadcast %25 : i1 to vector<24x1xi1>
    %27 = vector.broadcast %26 : vector<24x1xi1> to vector<24x1xi1>
    %28 = arith.xori %24, %27 : vector<24x1xi1>
    %29 = arith.andi %28, %22 : vector<24x1xi1>
    %30 = vector.broadcast %18 : i32 to vector<24x1xi32>
    %31 = arith.addi %20, %30 : vector<24x1xi32>
    %32 = arith.select %29, %31, %20 : vector<24x1xi1>, vector<24x1xi32>
    %c0_13 = arith.constant 0 : index
    %c0_14 = arith.constant 0 : index
    %33 = vector.load %arg5[%c0_13, %c0_14] : memref<2x256xf32, #tpu.memory_space<vmem>>, vector<2x256xf32>
    %34 = vector.extract_strided_slice %33 {offsets = [0, 0], sizes = [1, 256], strides = [1, 1]} : vector<2x256xf32> to vector<1x256xf32>
    %35 = vector.extract_strided_slice %33 {offsets = [1, 0], sizes = [1, 256], strides = [1, 1]} : vector<2x256xf32> to vector<1x256xf32>
    %36 = vector.extract_strided_slice %0 {offsets = [0, 1], sizes = [24, 1], strides = [1, 1]} : vector<24x2xf32> to vector<24x1xf32>
    %c0_i32_15 = arith.constant 0 : i32
    %37 = vector.broadcast %c0_i32_15 : i32 to vector<24x1xi32>
    %38 = arith.cmpi eq, %32, %37 : vector<24x1xi32>
    %39 = vector.shape_cast %38 : vector<24x1xi1> to vector<24x1xi1>
    %40 = vector.broadcast %39 : vector<24x1xi1> to vector<24x256xi1>
    %41 = vector.shape_cast %34 : vector<1x256xf32> to vector<1x256xf32>
    %42 = vector.broadcast %41 : vector<1x256xf32> to vector<24x256xf32>
    %43 = vector.shape_cast %35 : vector<1x256xf32> to vector<1x256xf32>
    %44 = vector.broadcast %43 : vector<1x256xf32> to vector<24x256xf32>
    %45 = arith.select %40, %42, %44 : vector<24x256xi1>, vector<24x256xf32>
    %cst_16 = arith.constant 1.600000e+01 : f32
    %46 = vector.broadcast %cst_16 : f32 to vector<24x256xf32>
    %47 = arith.mulf %15, %46 : vector<24x256xf32>
    %48 = arith.addf %47, %45 : vector<24x256xf32>
    %cst_17 = arith.constant 2.000000e+00 : f32
    %49 = vector.broadcast %cst_17 : f32 to vector<24x256xf32>
    %50 = arith.mulf %15, %49 : vector<24x256xf32>
    %51 = arith.mulf %50, %50 : vector<24x256xf32>
    %52 = vector.broadcast %36 : vector<24x1xf32> to vector<24x256xf32>
    %53 = arith.mulf %51, %52 : vector<24x256xf32>
    %c2_i32 = arith.constant 2 : i32
    %54 = vector.broadcast %c2_i32 : i32 to vector<24x1xi32>
    %55 = arith.cmpi slt, %32, %54 : vector<24x1xi32>
    %c4_i32 = arith.constant 4 : i32
    %56 = vector.broadcast %c4_i32 : i32 to vector<24x1xi32>
    %57 = arith.cmpi slt, %32, %56 : vector<24x1xi32>
    %58 = vector.shape_cast %57 : vector<24x1xi1> to vector<24x1xi1>
    %59 = vector.broadcast %58 : vector<24x1xi1> to vector<24x256xi1>
    %60 = arith.select %59, %53, %15 : vector<24x256xi1>, vector<24x256xf32>
    %61 = vector.shape_cast %55 : vector<24x1xi1> to vector<24x1xi1>
    %62 = vector.broadcast %61 : vector<24x1xi1> to vector<24x256xi1>
    %63 = arith.select %62, %48, %60 : vector<24x256xi1>, vector<24x256xf32>
    %c0_18 = arith.constant 0 : index
    %c0_19 = arith.constant 0 : index
    %c0_20 = arith.constant 0 : index
    %64 = vector.load %arg7[%c0_18, %c0_19, %c0_20] : memref<1x24x256xf32, #tpu.memory_space<vmem>>, vector<1x24x256xf32>
    %65 = vector.shape_cast %64 : vector<1x24x256xf32> to vector<24x256xf32>
    %66 = vector.shape_cast %63 : vector<24x256xf32> to vector<1x24x256xf32>
    tpu.vector_store %arg7[%c0_18, %c0_19, %c0_20], %66 {strides = array<i32>} : memref<1x24x256xf32, #tpu.memory_space<vmem>>, vector<1x24x256xf32>,
    return
  }
  func.func @transform_0(%arg0: i32, %arg1: i32) -> (i32, i32, i32) {
    %c0_i32 = arith.constant 0 : i32
    %c0_i32_0 = arith.constant 0 : i32
    return %arg0, %c0_i32, %arg1 : i32, i32, i32
  }
  func.func @transform_1(%arg0: i32, %arg1: i32) -> (i32, i32) {
    %c0_i32 = arith.constant 0 : i32
    %c0_i32_0 = arith.constant 0 : i32
    %c0_i32_1 = arith.constant 0 : i32
    return %c0_i32, %c0_i32_0 : i32, i32
  }
  func.func @transform_2(%arg0: i32, %arg1: i32) -> (i32, i32) {
    %c0_i32 = arith.constant 0 : i32
    %c0_i32_0 = arith.constant 0 : i32
    %c0_i32_1 = arith.constant 0 : i32
    return %c0_i32, %c0_i32_0 : i32, i32
  }
  func.func @transform_3(%arg0: i32, %arg1: i32) -> (i32, i32) {
    %c0_i32 = arith.constant 0 : i32
    %c0_i32_0 = arith.constant 0 : i32
    return %c0_i32, %arg1 : i32, i32
  }
  func.func @transform_4(%arg0: i32, %arg1: i32) -> (i32, i32, i32) {
    %c0_i32 = arith.constant 0 : i32
    %c0_i32_0 = arith.constant 0 : i32
    return %arg0, %c0_i32, %arg1 : i32, i32, i32
  }
  func.func @transform_5(%arg0: i32, %arg1: i32) -> (i32, i32, i32) {
    %c0_i32 = arith.constant 0 : i32
    %c0_i32_0 = arith.constant 0 : i32
    return %arg0, %c0_i32, %arg1 : i32, i32, i32
  }
}

</mosaic_0001>

<llo_original>
// kernel: tpu_custom_call.1
$region0: #{tpu_custom_call.1}
  #allocation0 [shape = 'u32[]', space=smem, size = 0x4, offset = 0x4, fixed_abs, tag = 'smem constant byte address 0x4 - core index']
  #allocation1 [shape = 'u32[144,128]{1,0:T(1,128)}', space=vmem, size = 0x12000, scoped, tag = 'internal scratch']
  %s0 = inlined_call_operand.vmem [shape: f32[2,4,256], index: 0, kind: input, shape index: {}]
  %s1 = inlined_call_operand.vmem [shape: f32[24,4], index: 1, kind: input, shape index: {}]
  %s2 = inlined_call_operand.vmem [shape: f32[24,2], index: 2, kind: input, shape index: {}]
  %s3 = inlined_call_operand.vmem [shape: f32[2,256], index: 3, kind: input, shape index: {}]
  %s4 = inlined_call_operand.hbm [shape: f32[2,24,256], index: 4, kind: output, shape index: {0}]
  %s5 = inlined_call_operand.hbm [shape: f32[2,24,256], index: 5, kind: output, shape index: {1}]
  %6 = xla_tuple %s4, %s5
  %s7 = sld [smem:[#allocation0]]
  $region57: #{tpu_custom_call.1} parent=0
    _
  %s9 = ssub.s32 1, %s7
  %s10 = scalar_select 0, %s9, %s7
  $region1: #{tpu_custom_call.1} parent=0
    #allocation2 [shape = 'u8[49152]{0}', space=vmem, size = 0xc000, scoped, tag = 'output window, operand 0']
    #allocation3 [shape = 's32[2]{0}', space=sflag, size = 0x8, scoped, tag = 'scoped memory for tpu_custom_call.1']
    #allocation4 [shape = 'u8[49152]{0}', space=vmem, size = 0xc000, scoped, tag = 'output window, operand 1']
    #allocation5 [shape = 's32[2]{0}', space=sflag, size = 0x8, scoped, tag = 'scoped memory for tpu_custom_call.1']
    %11 = vsyncpa [#allocation3], 0
    %s12 = scalar_lea.sflag [#allocation3], 1
    %13 = vsyncpa %s12, 0
    %14 = vsyncpa [#allocation5], 0
    %s15 = scalar_lea.sflag [#allocation5], 1
    %16 = vsyncpa %s15, 0
    loop: start=0, step=1, limit=4
    $region2: #{tpu_custom_call.1} parent=1 // loop_pre_header
      _
    $region3: #{tpu_custom_call.1} parent=1 // loop_header
      %s18 = sphi 0, %s22
      %p19 = scmp.ge.s32.totalorder %s18, 4
      %s25 = sphi 0, %s37
      %s26 = sphi 0, %s33
      %s27 = sphi 0, %s25
      %s28 = sphi 0, %s26
      %s29 = sphi 0, %s27
      %s30 = sphi 0, %s28
      %s42 = sphi 0, %s44
      %s45 = sphi 0, %s42
      %s46 = sphi 0, %s45
      %s62 = sphi 0, %s46
      %s66 = sphi 0, %s66
      %s68 = sphi 0, %s66
      %s69 = sphi 0, %s68
      %s83 = sphi 0, %s69
      %s87 = sphi 0, %s87
      %s89 = sphi 0, %s87
      %s90 = sphi 0, %s89
      %s104 = sphi 0, %s90
      %s110 = sphi 0, %s112
      %s113 = sphi 0, %s110
      %s114 = sphi 0, %s113
      %s130 = sphi 0, %s114
      %s138 = sphi 0, %s140
      %s141 = sphi 0, %s138
      %s142 = sphi 0, %s141
      %s158 = sphi 0, %s142
      %s166 = sphi 0, %s168
      %s169 = sphi 0, %s166
      %s170 = sphi 0, %s169
      %s186 = sphi 0, %s170
    $region4: #{tpu_custom_call.1} parent=1 // loop_header_branch
      %21 = sbr.rel (%p19) target = $region8
    $region5: #{tpu_custom_call.1} parent=1 // loop_body
      %s23 = ssub.s32 %s18, 1
      %s24 = ssub.s32 %s18, 2
      %s31 = sadd.s32 1, %s26
      %p32 = scmp.ge.s32.totalorder %s31, 1
      %s33 = scalar_select %p32, 0, %s31
      %s34 = sadd.s32 1, %s25
      %s35 = scalar_select %p32, %s34, %s25
      %p36 = scmp.ge.s32.totalorder %s35, 2
      %s37 = scalar_select %p36, 0, %s35
      %s38 = ssub.s32 %s25, %s37
      %s39 = ssub.s32 %s26, %s33
      %s40 = sor.u32 %s38, %s39
      %p41 = scmp.eq.s32.totalorder %s40, 0
      %s43 = sadd.s32 %s42, 1
      %s44 = scalar_select %p41, %s42, %s43
      %p47 = pneg %p41
      %p48 = scmp.eq.s32.totalorder %s18, 1
      %p49 = por %p47, %p48
      %p50 = scmp.ne.s32.totalorder %s42, %s45
      %p51 = scmp.eq.s32.totalorder %s18, 0
      %p52 = por %p50, %p51
      %p53 = scmp.ne.s32.totalorder %s42, %s45
      %p54 = scmp.eq.s32.totalorder %s23, 1
      %p55 = por %p53, %p54
      %p56 = scmp.ne.s32.totalorder %s45, %s46
      %p57 = scmp.eq.s32.totalorder %s23, 0
      %p58 = por %p56, %p57
      %p59 = scmp.ne.s32.totalorder %s45, %s46
      %p60 = scmp.eq.s32.totalorder %s24, 1
      %p61 = por %p59, %p60
      %p63 = scmp.ne.s32.totalorder %s46, %s62
      %p64 = scmp.eq.s32.totalorder %s24, 0
      %p65 = por %p63, %p64
      %s67 = sadd.s32 %s66, 1
      %p70 = scmp.eq.s32.totalorder %s18, 1
      %p71 = scmp.ne.s32.totalorder %s66, %s68
      %p72 = scmp.eq.s32.totalorder %s18, 0
      %p73 = por %p71, %p72
      %p74 = scmp.ne.s32.totalorder %s66, %s68
      %p75 = scmp.eq.s32.totalorder %s23, 1
      %p76 = por %p74, %p75
      %p77 = scmp.ne.s32.totalorder %s68, %s69
      %p78 = scmp.eq.s32.totalorder %s23, 0
      %p79 = por %p77, %p78
      %p80 = scmp.ne.s32.totalorder %s68, %s69
      %p81 = scmp.eq.s32.totalorder %s24, 1
      %p82 = por %p80, %p81
      %p84 = scmp.ne.s32.totalorder %s69, %s83
      %p85 = scmp.eq.s32.totalorder %s24, 0
      %p86 = por %p84, %p85
      %s88 = sadd.s32 %s87, 1
      %p91 = scmp.eq.s32.totalorder %s18, 1
      %p92 = scmp.ne.s32.totalorder %s87, %s89
      %p93 = scmp.eq.s32.totalorder %s18, 0
      %p94 = por %p92, %p93
      %p95 = scmp.ne.s32.totalorder %s87, %s89
      %p96 = scmp.eq.s32.totalorder %s23, 1
      %p97 = por %p95, %p96
      %p98 = scmp.ne.s32.totalorder %s89, %s90
      %p99 = scmp.eq.s32.totalorder %s23, 0
      %p100 = por %p98, %p99
      %p101 = scmp.ne.s32.totalorder %s89, %s90
      %p102 = scmp.eq.s32.totalorder %s24, 1
      %p103 = por %p101, %p102
      %p105 = scmp.ne.s32.totalorder %s90, %s104
      %p106 = scmp.eq.s32.totalorder %s24, 0
      %p107 = por %p105, %p106
      %s108 = ssub.s32 %s26, %s33
      %p109 = scmp.eq.s32.totalorder %s108, 0
      %s111 = sadd.s32 %s110, 1
      %s112 = scalar_select %p109, %s110, %s111
      %p115 = pneg %p109
      %p116 = scmp.eq.s32.totalorder %s18, 1
      %p117 = por %p115, %p116
      %p118 = scmp.ne.s32.totalorder %s110, %s113
      %p119 = scmp.eq.s32.totalorder %s18, 0
      %p120 = por %p118, %p119
      %p121 = scmp.ne.s32.totalorder %s110, %s113
      %p122 = scmp.eq.s32.totalorder %s23, 1
      %p123 = por %p121, %p122
      %p124 = scmp.ne.s32.totalorder %s113, %s114
      %p125 = scmp.eq.s32.totalorder %s23, 0
      %p126 = por %p124, %p125
      %p127 = scmp.ne.s32.totalorder %s113, %s114
      %p128 = scmp.eq.s32.totalorder %s24, 1
      %p129 = por %p127, %p128
      %p131 = scmp.ne.s32.totalorder %s114, %s130
      %p132 = scmp.eq.s32.totalorder %s24, 0
      %p133 = por %p131, %p132
      %s134 = ssub.s32 %s25, %s37
      %s135 = ssub.s32 %s26, %s33
      %s136 = sor.u32 %s134, %s135
      %p137 = scmp.eq.s32.totalorder %s136, 0
      %s139 = sadd.s32 %s138, 1
      %s140 = scalar_select %p137, %s138, %s139
      %p143 = pneg %p137
      %p144 = scmp.eq.s32.totalorder %s18, 1
      %p145 = por %p143, %p144
      %p146 = scmp.ne.s32.totalorder %s138, %s141
      %p147 = scmp.eq.s32.totalorder %s18, 0
      %p148 = por %p146, %p147
      %p149 = scmp.ne.s32.totalorder %s138, %s141
      %p150 = scmp.eq.s32.totalorder %s23, 1
      %p151 = por %p149, %p150
      %p152 = scmp.ne.s32.totalorder %s141, %s142
      %p153 = scmp.eq.s32.totalorder %s23, 0
      %p154 = por %p152, %p153
      %p155 = scmp.ne.s32.totalorder %s141, %s142
      %p156 = scmp.eq.s32.totalorder %s24, 1
      %p157 = por %p155, %p156
      %p159 = scmp.ne.s32.totalorder %s142, %s158
      %p160 = scmp.eq.s32.totalorder %s24, 0
      %p161 = por %p159, %p160
      %s162 = ssub.s32 %s25, %s37
      %s163 = ssub.s32 %s26, %s33
      %s164 = sor.u32 %s162, %s163
      %p165 = scmp.eq.s32.totalorder %s164, 0
      %s167 = sadd.s32 %s166, 1
      %s168 = scalar_select %p165, %s166, %s167
      %p171 = pneg %p165
      %p172 = scmp.eq.s32.totalorder %s18, 1
      %p173 = por %p171, %p172
      %p174 = scmp.ne.s32.totalorder %s166, %s169
      %p175 = scmp.eq.s32.totalorder %s18, 0
      %p176 = por %p174, %p175
      %p177 = scmp.ne.s32.totalorder %s166, %s169
      %p178 = scmp.eq.s32.totalorder %s23, 1
      %p179 = por %p177, %p178
      %p180 = scmp.ne.s32.totalorder %s169, %s170
      %p181 = scmp.eq.s32.totalorder %s23, 0
      %p182 = por %p180, %p181
      %p183 = scmp.ne.s32.totalorder %s169, %s170
      %p184 = scmp.eq.s32.totalorder %s24, 1
      %p185 = por %p183, %p184
      %p187 = scmp.ne.s32.totalorder %s170, %s186
      %p188 = scmp.eq.s32.totalorder %s24, 0
      %p189 = por %p187, %p188
      %p190 = scmp.le.s32.totalorder 1, %s18
      %p191 = scmp.lt.s32.totalorder %s18, 3
      %p192 = pnand %p190, %p191
      %p193 = pneg %p192
      // Predicated region
      $region9: #{tpu_custom_call.1} parent=5 // pred_check
        _
      $region10: #{tpu_custom_call.1} parent=5 // pred_check_branch
        %195 = sbr.rel (%p192) target = $region12
      $region11: #{tpu_custom_call.1} parent=5 // pred_region
        %s196 = ssub.s32 %s18, 1
        // Predicated region
        $region13: #{tpu_custom_call.1} parent=11 // pred_check
          %p197 = pneg %p79
        $region14: #{tpu_custom_call.1} parent=11 // pred_check_branch
          %199 = sbr.rel (%p197) target = $region16
        $region15: #{tpu_custom_call.1} parent=11 // pred_region
          _
        $region16: #{tpu_custom_call.1} parent=11 // pred_fallthru
          _
        // Predicated region
        $region17: #{tpu_custom_call.1} parent=11 // pred_check
          %p200 = pneg %p100
        $region18: #{tpu_custom_call.1} parent=11 // pred_check_branch
          %202 = sbr.rel (%p200) target = $region20
        $region19: #{tpu_custom_call.1} parent=11 // pred_region
          _
        $region20: #{tpu_custom_call.1} parent=11 // pred_fallthru
          _
        // Predicated region
        $region21: #{tpu_custom_call.1} parent=11 // pred_check
          %p203 = pneg %p126
        $region22: #{tpu_custom_call.1} parent=11 // pred_check_branch
          %205 = sbr.rel (%p203) target = $region24
        $region23: #{tpu_custom_call.1} parent=11 // pred_region
          %s206 = smul.u32 2, %s28
          %p207 = scmp.lt.s32.totalorder %s206, 1
          %s208 = scalar_select %p207, %s206, 1
          %s209 = smul.addr %s208, 2
          %s210 = scalar_lea.vmem %s3, %s209
          %s211 = smul.u32 2, %s28
        $region24: #{tpu_custom_call.1} parent=11 // pred_fallthru
          _
      $region12: #{tpu_custom_call.1} parent=5 // pred_fallthru
        _
      %p212 = scmp.lt.s32.totalorder %s18, 2
      // Predicated region
      $region25: #{tpu_custom_call.1} parent=5 // pred_check
        %p213 = pneg %p212
      $region26: #{tpu_custom_call.1} parent=5 // pred_check_branch
        %215 = sbr.rel (%p213) target = $region28
      $region27: #{tpu_custom_call.1} parent=5 // pred_region
        // Predicated region
        $region29: #{tpu_custom_call.1} parent=27 // pred_check
          %p216 = pneg %p52
        $region30: #{tpu_custom_call.1} parent=27 // pred_check_branch
          %218 = sbr.rel (%p216) target = $region32
        $region31: #{tpu_custom_call.1} parent=27 // pred_region
          %s219 = smul.u32 2, %s26
          %p220 = scmp.lt.s32.totalorder %s25, 1
          %s221 = scalar_select %p220, %s25, 1
          %p222 = scmp.lt.s32.totalorder %s219, 1
          %s223 = scalar_select %p222, %s219, 1
          %s224 = smul.addr %s221, 2
          %s225 = sadd.s32 %s223, %s224
          %s226 = smul.addr %s225, 4
          %s227 = scalar_lea.vmem %s0, %s226
          %s228 = smul.u32 2, %s26
        $region32: #{tpu_custom_call.1} parent=27 // pred_fallthru
          _
      $region28: #{tpu_custom_call.1} parent=5 // pred_fallthru
        _
      %p229 = scmp.le.s32.totalorder 1, %s18
      %p230 = scmp.lt.s32.totalorder %s18, 3
      %p231 = pnand %p229, %p230
      %p232 = pneg %p231
      // Predicated region
      $region33: #{tpu_custom_call.1} parent=5 // pred_check
        _
      $region34: #{tpu_custom_call.1} parent=5 // pred_check_branch
        %234 = sbr.rel (%p231) target = $region36
      $region35: #{tpu_custom_call.1} parent=5 // pred_region
        %s235 = ssub.s32 %s18, 1
        %s236 = smul.u32 2, %s28
        %p237 = scmp.lt.s32.totalorder %s27, 1
        %s238 = scalar_select %p237, %s27, 1
        %p239 = scmp.lt.s32.totalorder %s236, 1
        %s240 = scalar_select %p239, %s236, 1
        %s241 = smul.addr %s238, 2
        %s242 = sadd.s32 %s240, %s241
        %s243 = smul.addr %s242, 4
        %s244 = scalar_lea.vmem %s0, %s243
        %p245 = pneg %p58
        %p246 = pneg %p55
        %p247 = pneg %p79
        %p248 = pneg %p76
        %p249 = pneg %p100
        %p250 = pneg %p97
        %s251 = smul.u32 2, %s28
        %p252 = scmp.lt.s32.totalorder %s251, 1
        %s253 = scalar_select %p252, %s251, 1
        %s254 = smul.addr %s253, 2
        %s255 = scalar_lea.vmem %s3, %s254
        %p256 = pneg %p126
        %p257 = pneg %p123
        %p258 = pneg %p154
        %p259 = pneg %p151
        %s260 = sand.u32 %s141, 1
        %s261 = scalar_lea.sflag [#allocation3], %s260
        %s262 = sand.u32 %s141, 1
        %s263 = smul.addr %s262, 48
        %s264 = scalar_lea.vmem [#allocation2], %s263
        %p265 = pneg %p182
        %p266 = pneg %p179
        %s267 = sand.u32 %s169, 1
        %s268 = scalar_lea.sflag [#allocation5], %s267
        %s269 = sand.u32 %s169, 1
        %s270 = smul.addr %s269, 48
        %s271 = scalar_lea.vmem [#allocation4], %s270
        %s272 = smul.u32 2, %s28
        %p273 = scmp.lt.s32.totalorder %s27, 1
        %s274 = scalar_select %p273, %s27, 1
        %p275 = scmp.lt.s32.totalorder %s272, 1
        %s276 = scalar_select %p275, %s272, 1
        %s277 = smul.addr %s274, 2
        %s278 = sadd.s32 %s276, %s277
        %s279 = smul.addr %s278, 4
        %s280 = scalar_lea.vmem %s0, %s279
        %s281 = smul.u32 2, %s28
        %s282 = smul.u32 2, %s28
        %p283 = scmp.lt.s32.totalorder %s282, 1
        %s284 = scalar_select %p283, %s282, 1
        %s285 = smul.addr %s284, 2
        %s286 = scalar_lea.vmem %s3, %s285
        %s287 = smul.u32 2, %s28
        %s288 = smul.u32 2, %s28
        %s289 = smul.u32 2, %s28
        %v290 = vld [vmem:[%s2] sm:$0xff]
        %v291 = vld [vmem:[%s2 + $0x8] sm:$0xff]
        %v292 = vld [vmem:[%s2 + $0x10] sm:$0xff]
        %v293 = vld [vmem:[%s1] sm:$0xff]
        %v294 = vld [vmem:[%s1 + $0x8] sm:$0xff]
        %v295 = vld [vmem:[%s1 + $0x10] sm:$0xff]
        %v296 = vld [vmem:[%s280] sm:$0xff]
        %298 = vset.pattern.permute.xlu0 0
        %299 = vperm.xlu0 %298, %v290
        %v300 = vpop.permute.xlu0 %299
        %303 = vset.pattern.permute.xlu0 0
        %304 = vperm.xlu0 %303, %v291
        %v305 = vpop.permute.xlu0 %304
        %308 = vset.pattern.permute.xlu0 0
        %309 = vperm.xlu0 %308, %v292
        %v310 = vpop.permute.xlu0 %309
        %v313 = vcombine.high %v296, %v296
        %vm314 = vcmask 31744
        %v316 = vsel %vm314, %v293, 0
        %v319 = vsel %vm314, %v294, 0
        %v322 = vsel %vm314, %v295, 0
        %vm324 = vcmask 1043456
        %v325 = vsel %vm324, %v296, 0
        %v327 = vsel %vm324, %v313, 0
        %329 = vmatprep.subr.mxu0 %v327
        %330 = vmatpush1.msra.mxu0 %v325
        %331 = vmatprep.subr.mxu0 0.0
        %332 = vmatpush1.msra.mxu0 0.0
        %333 = vmatprep.subr.mxu0 0.0
        %334 = vmatpush1.msra.mxu0 0.0
        %335 = vmatprep.subr.mxu0 0.0
        %336 = vmatpush1.msra.mxu0 0.0
        %337 = vmatprep.subr.mxu0 0.0
        %338 = vmatpush1.msra.mxu0 0.0
        %339 = vmatprep.subr.mxu0 0.0
        %340 = vmatpush1.msra.mxu0 0.0
        %341 = vmatprep.subr.mxu0 0.0
        %342 = vmatpush1.msra.mxu0 0.0
        %343 = vmatprep.subr.mxu0 0.0
        %344 = vmatpush1.msra.mxu0 0.0
        %345 = vmatprep.subr.mxu0 0.0
        %346 = vmatpush1.msra.mxu0 0.0
        %347 = vmatprep.subr.mxu0 0.0
        %348 = vmatpush1.msra.mxu0 0.0
        %349 = vmatprep.subr.mxu0 0.0
        %350 = vmatpush1.msra.mxu0 0.0
        %351 = vmatprep.subr.mxu0 0.0
        %352 = vmatpush1.msra.mxu0 0.0
        %353 = vmatprep.subr.mxu0 0.0
        %354 = vmatpush1.msra.mxu0 0.0
        %355 = vmatprep.subr.mxu0 0.0
        %356 = vmatpush1.msra.mxu0 0.0
        %357 = vmatprep.subr.mxu0 0.0
        %358 = vmatpush1.msra.mxu0 0.0
        %359 = vmatprep.subr.mxu0 0.0
        %360 = vmatpush1.msra.mxu0 0.0
        %361 = vmatprep.subr.mxu0 0.0
        %362 = vmatpush1.msra.mxu0 0.0
        %363 = vmatprep.subr.mxu0 0.0
        %364 = vmatpush1.msra.mxu0 0.0
        %365 = vmatprep.subr.mxu0 0.0
        %366 = vmatpush1.msra.mxu0 0.0
        %367 = vmatprep.subr.mxu0 0.0
        %368 = vmatpush1.msra.mxu0 0.0
        %369 = vmatprep.subr.mxu0 0.0
        %370 = vmatpush1.msra.mxu0 0.0
        %371 = vmatprep.subr.mxu0 0.0
        %372 = vmatpush1.msra.mxu0 0.0
        %373 = vmatprep.subr.mxu0 0.0
        %374 = vmatpush1.msra.mxu0 0.0
        %375 = vmatprep.subr.mxu0 0.0
        %376 = vmatpush1.msra.mxu0 0.0
        %377 = vmatprep.subr.mxu0 0.0
        %378 = vmatpush1.msra.mxu0 0.0
        %379 = vmatprep.subr.mxu0 0.0
        %380 = vmatpush1.msra.mxu0 0.0
        %381 = vmatprep.subr.mxu0 0.0
        %382 = vmatpush1.msra.mxu0 0.0
        %383 = vmatprep.subr.mxu0 0.0
        %384 = vmatpush1.msra.mxu0 0.0
        %385 = vmatprep.subr.mxu0 0.0
        %386 = vmatpush1.msra.mxu0 0.0
        %387 = vmatprep.subr.mxu0 0.0
        %388 = vmatpush1.msra.mxu0 0.0
        %389 = vmatprep.subr.mxu0 0.0
        %390 = vmatpush1.msra.mxu0 0.0
        %391 = vmatprep.subr.mxu0 0.0
        %392 = vmatpush1.msra.mxu0 0.0
        %393 = vmatprep.mubr.f32.mxu0 0.0
        %394 = vmatmul.mubr.f32.gmra.mrb[0].mxu0 %v316
        %v395 = vpop.f32.mrb[0].mxu0
        %v396 = vadd.f32 %v300, %v395
        %v397 = vpop.f32.mrb[0].mxu0
        %v398 = vadd.f32 %v300, %v397
        %399 = vmatprep.mubr.f32.mxu0 0.0
        %400 = vmatmul.mubr.f32.gmra.mrb[0].mxu0 %v319
        %v401 = vpop.f32.mrb[0].mxu0
        %v402 = vadd.f32 %v305, %v401
        %v403 = vpop.f32.mrb[0].mxu0
        %v404 = vadd.f32 %v305, %v403
        %405 = vmatprep.mubr.f32.mxu0 0.0
        %406 = vmatmul.mubr.f32.gmra.mrb[0].mxu0 %v322
        %v407 = vpop.f32.mrb[0].mxu0
        %v408 = vadd.f32 %v310, %v407
        %v409 = vpop.f32.mrb[0].mxu0
        %v410 = vadd.f32 %v310, %v409
        %411 = vdwg.mxu0
        %412 = vst [vmem:[%s264] sm:$0xff] %v396
        %413 = vst [vmem:[%s264 + $0x8] sm:$0xff] %v398
        %414 = vst [vmem:[%s264 + $0x10] sm:$0xff] %v402
        %415 = vst [vmem:[%s264 + $0x18] sm:$0xff] %v404
        %416 = vst [vmem:[%s264 + $0x20] sm:$0xff] %v408
        %417 = vst [vmem:[%s264 + $0x28] sm:$0xff] %v410
        %v418 = vxor.u32 %v396, 2147483648
        %v419 = vxor.u32 %v398, 2147483648
        %v420 = vxor.u32 %v402, 2147483648
        %v421 = vxor.u32 %v404, 2147483648
        %v422 = vxor.u32 %v408, 2147483648
        %v423 = vxor.u32 %v410, 2147483648
        %v424 = vmul.f32 %v418, 1.442695
        %v425 = vpow.pop %v424
        %v426 = vmul.f32 %v419, 1.442695
        %v427 = vpow.pop %v426
        %v428 = vmul.f32 %v420, 1.442695
        %v429 = vpow.pop %v428
        %v430 = vmul.f32 %v421, 1.442695
        %v431 = vpow.pop %v430
        %v432 = vmul.f32 %v422, 1.442695
        %v433 = vpow.pop %v432
        %v434 = vmul.f32 %v423, 1.442695
        %v435 = vpow.pop %v434
        %v436 = vadd.f32 %v425, 1.0
        %v437 = vadd.f32 %v427, 1.0
        %v438 = vadd.f32 %v429, 1.0
        %v439 = vadd.f32 %v431, 1.0
        %v440 = vadd.f32 %v433, 1.0
        %v441 = vadd.f32 %v435, 1.0
        %v442 = vrcp.pop %v436
        %v443 = vmul.f32 1.0, %v442
        %v444 = vrcp.pop %v437
        %v445 = vmul.f32 1.0, %v444
        %v446 = vrcp.pop %v438
        %v447 = vmul.f32 1.0, %v446
        %v448 = vrcp.pop %v439
        %v449 = vmul.f32 1.0, %v448
        %v450 = vrcp.pop %v440
        %v451 = vmul.f32 1.0, %v450
        %v452 = vrcp.pop %v441
        %v453 = vmul.f32 1.0, %v452
        %v454 = vlaneseq
        %v455 = vshrl.u32 %v454, 7
        %v456 = vadd.s32 %v455, 8
        %v457 = vadd.s32 %v455, 16
        %vm458 = vcmp.lt.s32.totalorder %v455, 0
        %v459 = vsub.s32 0, %v455
        %v460 = vsel %vm458, %v459, %v455
        %v461 = vshrl.u32 %v460, 3
        %v462 = vand.u32 %v460, 7
        %v463 = vsub.s32 0, %v462
        %v464 = vsel %vm458, %v463, %v462
        %vm465 = vcmp.lt.s32.totalorder %v456, 0
        %v466 = vsub.s32 0, %v456
        %v467 = vsel %vm465, %v466, %v456
        %v468 = vshrl.u32 %v467, 3
        %v469 = vand.u32 %v467, 7
        %v470 = vsub.s32 0, %v469
        %v471 = vsel %vm465, %v470, %v469
        %vm472 = vcmp.lt.s32.totalorder %v457, 0
        %v473 = vsub.s32 0, %v457
        %v474 = vsel %vm472, %v473, %v457
        %v475 = vshrl.u32 %v474, 3
        %v476 = vand.u32 %v474, 7
        %v477 = vsub.s32 0, %v476
        %v478 = vsel %vm472, %v477, %v476
        %vm479 = vcmp.ne.s32.totalorder %v464, 0
        %vm480 = vcmp.ne.s32.totalorder %v471, 0
        %vm481 = vcmp.ne.s32.totalorder %v478, 0
        %vm482 = vcmp.lt.s32.totalorder %v464, 0
        %vm483 = vcmp.lt.s32.totalorder %v471, 0
        %vm484 = vcmp.lt.s32.totalorder %v478, 0
        %vm485 = vmand %vm482, %vm479
        %vm486 = vmand %vm483, %vm480
        %vm487 = vmand %vm484, %vm481
        %v488 = vadd.s32 %v464, 8
        %v489 = vadd.s32 %v471, 8
        %v490 = vadd.s32 %v478, 8
        %v491 = vsel %vm485, %v488, %v464
        %v492 = vsel %vm486, %v489, %v471
        %v493 = vsel %vm487, %v490, %v478
        %v494 = vld [vmem:[%s286] sm:$0xf]
        %vm495 = vcmp.eq.s32.totalorder %v491, 0
        %vm496 = vcmp.eq.s32.totalorder %v492, 0
        %vm497 = vcmp.eq.s32.totalorder %v493, 0
        %v498 = vsel %vm495, 1, 0
        %v499 = vsel %vm496, 1, 0
        %v500 = vsel %vm497, 1, 0
        %vm501 = vcmp.eq.s32.totalorder %v498, 1
        %vm502 = vcmp.eq.s32.totalorder %v499, 1
        %vm503 = vcmp.eq.s32.totalorder %v500, 1
        %v505 = vlaneseq
        %v506 = vshrl.u32 %v505, 7
        %v507 = vsub.s32 0, %v506
        %v508 = vrot.slane %v494, %v507
        %v509 = vlaneseq
        %v510 = vshrl.u32 %v509, 7
        %v511 = vsub.s32 2, %v510
        %v512 = vrot.slane %v494, %v511
        %v515 = vlaneseq
        %v516 = vshrl.u32 %v515, 7
        %v517 = vsub.s32 0, %v516
        %v518 = vrot.slane %v508, %v517
        %v519 = vlaneseq
        %v520 = vshrl.u32 %v519, 7
        %v521 = vsub.s32 0, %v520
        %v522 = vrot.slane %v512, %v521
        %v523 = vlaneseq
        %v524 = vshrl.u32 %v523, 7
        %v525 = vsub.s32 1, %v524
        %v526 = vrot.slane %v494, %v525
        %v527 = vlaneseq
        %v528 = vshrl.u32 %v527, 7
        %v529 = vsub.s32 3, %v528
        %v530 = vrot.slane %v494, %v529
        %v533 = vlaneseq
        %v534 = vshrl.u32 %v533, 7
        %v535 = vsub.s32 1, %v534
        %v536 = vrot.slane %v526, %v535
        %v537 = vlaneseq
        %v538 = vshrl.u32 %v537, 7
        %v539 = vsub.s32 1, %v538
        %v540 = vrot.slane %v530, %v539
        %v541 = vsel %vm501, %v518, %v536
        %v542 = vsel %vm501, %v522, %v540
        %v543 = vsel %vm502, %v518, %v536
        %v544 = vsel %vm502, %v522, %v540
        %v545 = vsel %vm503, %v518, %v536
        %v546 = vsel %vm503, %v522, %v540
        %v547 = vmul.f32 %v443, 16.0
        %v548 = vmul.f32 %v445, 16.0
        %v549 = vmul.f32 %v447, 16.0
        %v550 = vmul.f32 %v449, 16.0
        %v551 = vmul.f32 %v451, 16.0
        %v552 = vmul.f32 %v453, 16.0
        %v553 = vadd.f32 %v547, %v541
        %v554 = vadd.f32 %v548, %v542
        %v555 = vadd.f32 %v549, %v543
        %v556 = vadd.f32 %v550, %v544
        %v557 = vadd.f32 %v551, %v545
        %v558 = vadd.f32 %v552, %v546
        %v559 = vmul.f32 %v443, 2.0
        %v560 = vmul.f32 %v445, 2.0
        %v561 = vmul.f32 %v447, 2.0
        %v562 = vmul.f32 %v449, 2.0
        %v563 = vmul.f32 %v451, 2.0
        %v564 = vmul.f32 %v453, 2.0
        %v565 = vmul.f32 %v559, %v559
        %v566 = vmul.f32 %v560, %v560
        %v567 = vmul.f32 %v561, %v561
        %v568 = vmul.f32 %v562, %v562
        %v569 = vmul.f32 %v563, %v563
        %v570 = vmul.f32 %v564, %v564
        %571 = vset.pattern.permute.xlu0 1
        %572 = vperm.xlu0 %571, %v290
        %v573 = vpop.permute.xlu0 %572
        %575 = vset.pattern.permute.xlu0 1
        %576 = vperm.xlu0 %575, %v291
        %v577 = vpop.permute.xlu0 %576
        %579 = vset.pattern.permute.xlu0 1
        %580 = vperm.xlu0 %579, %v292
        %v581 = vpop.permute.xlu0 %580
        %v583 = vmul.f32 %v565, %v573
        %v584 = vmul.f32 %v566, %v573
        %v585 = vmul.f32 %v567, %v577
        %v586 = vmul.f32 %v568, %v577
        %v587 = vmul.f32 %v569, %v581
        %v588 = vmul.f32 %v570, %v581
        %vm589 = vcmp.lt.s32.totalorder %v491, 2
        %vm590 = vcmp.lt.s32.totalorder %v492, 2
        %vm591 = vcmp.lt.s32.totalorder %v493, 2
        %vm592 = vcmp.lt.s32.totalorder %v491, 4
        %vm593 = vcmp.lt.s32.totalorder %v492, 4
        %vm594 = vcmp.lt.s32.totalorder %v493, 4
        %v595 = vsel %vm592, 1, 0
        %v596 = vsel %vm593, 1, 0
        %v597 = vsel %vm594, 1, 0
        %vm598 = vcmp.eq.s32.totalorder %v595, 1
        %vm599 = vcmp.eq.s32.totalorder %v596, 1
        %vm600 = vcmp.eq.s32.totalorder %v597, 1
        %v601 = vsel %vm598, %v583, %v443
        %v602 = vsel %vm598, %v584, %v445
        %v603 = vsel %vm599, %v585, %v447
        %v604 = vsel %vm599, %v586, %v449
        %v605 = vsel %vm600, %v587, %v451
        %v606 = vsel %vm600, %v588, %v453
        %v607 = vsel %vm589, 1, 0
        %v608 = vsel %vm590, 1, 0
        %v609 = vsel %vm591, 1, 0
        %vm610 = vcmp.eq.s32.totalorder %v607, 1
        %vm611 = vcmp.eq.s32.totalorder %v608, 1
        %vm612 = vcmp.eq.s32.totalorder %v609, 1
        %v613 = vsel %vm610, %v553, %v601
        %v614 = vsel %vm610, %v554, %v602
        %v615 = vsel %vm611, %v555, %v603
        %v616 = vsel %vm611, %v556, %v604
        %v617 = vsel %vm612, %v557, %v605
        %v618 = vsel %vm612, %v558, %v606
        %619 = vst [vmem:[%s271] sm:$0xff] %v613
        %620 = vst [vmem:[%s271 + $0x8] sm:$0xff] %v614
        %621 = vst [vmem:[%s271 + $0x10] sm:$0xff] %v615
        %622 = vst [vmem:[%s271 + $0x18] sm:$0xff] %v616
        %623 = vst [vmem:[%s271 + $0x20] sm:$0xff] %v617
        %624 = vst [vmem:[%s271 + $0x28] sm:$0xff] %v618
        %s625 = sand.u32 %s141, 1
        %s626 = scalar_lea.sflag [#allocation3], %s625
        %s627 = sand.u32 %s141, 1
        %s628 = smul.addr %s627, 48
        %s629 = scalar_lea.vmem [#allocation2], %s628
        %s630 = sand.u32 %s169, 1
        %s631 = scalar_lea.sflag [#allocation5], %s630
        %s632 = sand.u32 %s169, 1
        %s633 = smul.addr %s632, 48
        %s634 = scalar_lea.vmem [#allocation4], %s633
        // Predicated region
        $region37: #{tpu_custom_call.1} parent=35 // pred_check
          %p635 = pneg %p151
        $region38: #{tpu_custom_call.1} parent=35 // pred_check_branch
          %637 = sbr.rel (%p635) target = $region40
        $region39: #{tpu_custom_call.1} parent=35 // pred_region
          %s638 = smul.u32 2, %s28
          %s640 = ssub.s32 768, 768
          %641 = vsyncadd %s626, %s640
          %s642 = smul.addr %s27, 6
          %s643 = sadd.s32 %s638, %s642
          %s644 = smul.addr %s643, 128
          %s645 = scalar_lea.hbm %s4, %s644
          %s646 = sshll.u32 %s629, 4
          %s647 = int_to_ptr.vmem [resolvable:$true] %s646
          %652 = dma.vmem_to_hbm [thread:$0]  %s647, 768, %s645, %s626, 256, 256, 16
        $region40: #{tpu_custom_call.1} parent=35 // pred_fallthru
          _
        // Predicated region
        $region41: #{tpu_custom_call.1} parent=35 // pred_check
          %p653 = pneg %p179
        $region42: #{tpu_custom_call.1} parent=35 // pred_check_branch
          %655 = sbr.rel (%p653) target = $region44
        $region43: #{tpu_custom_call.1} parent=35 // pred_region
          %s656 = smul.u32 2, %s28
          %s658 = ssub.s32 768, 768
          %659 = vsyncadd %s631, %s658
          %s660 = smul.addr %s27, 6
          %s661 = sadd.s32 %s656, %s660
          %s662 = smul.addr %s661, 128
          %s663 = scalar_lea.hbm %s5, %s662
          %s664 = sshll.u32 %s634, 4
          %s665 = int_to_ptr.vmem [resolvable:$true] %s664
          %670 = dma.vmem_to_hbm [thread:$0]  %s665, 768, %s663, %s631, 256, 256, 16
        $region44: #{tpu_custom_call.1} parent=35 // pred_fallthru
          _
      $region36: #{tpu_custom_call.1} parent=5 // pred_fallthru
        _
      %p671 = scmp.le.s32.totalorder 2, %s18
      // Predicated region
      $region45: #{tpu_custom_call.1} parent=5 // pred_check
        %p672 = pneg %p671
      $region46: #{tpu_custom_call.1} parent=5 // pred_check_branch
        %674 = sbr.rel (%p672) target = $region48
      $region47: #{tpu_custom_call.1} parent=5 // pred_region
        %s675 = ssub.s32 %s18, 2
        // Predicated region
        $region49: #{tpu_custom_call.1} parent=47 // pred_check
          %p676 = pneg %p157
        $region50: #{tpu_custom_call.1} parent=47 // pred_check_branch
          %678 = sbr.rel (%p676) target = $region52
        $region51: #{tpu_custom_call.1} parent=47 // pred_region
          %s679 = sand.u32 %s142, 1
          %s680 = scalar_lea.sflag [#allocation3], %s679
          %s681 = sand.u32 %s142, 1
          %s682 = smul.addr %s681, 48
          %s683 = scalar_lea.vmem [#allocation2], %s682
          %684 = dma.done %s680, 768
        $region52: #{tpu_custom_call.1} parent=47 // pred_fallthru
          _
        // Predicated region
        $region53: #{tpu_custom_call.1} parent=47 // pred_check
          %p685 = pneg %p185
        $region54: #{tpu_custom_call.1} parent=47 // pred_check_branch
          %687 = sbr.rel (%p685) target = $region56
        $region55: #{tpu_custom_call.1} parent=47 // pred_region
          %s688 = sand.u32 %s170, 1
          %s689 = scalar_lea.sflag [#allocation5], %s688
          %s690 = sand.u32 %s170, 1
          %s691 = smul.addr %s690, 48
          %s692 = scalar_lea.vmem [#allocation4], %s691
          %693 = dma.done %s689, 768
        $region56: #{tpu_custom_call.1} parent=47 // pred_fallthru
          _
      $region48: #{tpu_custom_call.1} parent=5 // pred_fallthru
        _
    $region6: #{tpu_custom_call.1} parent=1 // loop_footer
      %s22 = sadd.s32 1, %s18
    $region7: #{tpu_custom_call.1} parent=1 // loop_footer_branch
      %17 = sbr.rel target = $region3
    $region8: #{tpu_custom_call.1} parent=1 // loop_exit
      _
    %694 = vsyncpa [#allocation3], 1
    %s695 = scalar_lea.sflag [#allocation3], 1
    %696 = vsyncpa %s695, 1
    %697 = vsyncpa [#allocation5], 1
    %s698 = scalar_lea.sflag [#allocation5], 1
    %699 = vsyncpa %s698, 1

</llo_original>
